<compile_context>
chip_gen: v5e
topology: v5e:2x2
jax: 0.10.0
libtpu: 0.0.40
codegen_flags: <defaults>
</compile_context>

<pallas_src>
import functools

import jax
import jax.numpy as jnp
from jax.experimental import pallas as pl
from jax.experimental.pallas import tpu as pltpu


def mlp_kernel(x_ref, w1_ref, b1_ref, w2_ref, b2_ref, w3_ref, b3_ref, o_ref):
    x = x_ref[...]                                            # (10, TB)

    # Layer 1: Linear(10 -> 15) + ReLU
    h1 = jnp.dot(w1_ref[...], x, preferred_element_type=jnp.float32)
    h1 = jnp.maximum(h1 + b1_ref[...], 0.0)                   # (15, TB)

    # Layer 2: Linear(15 -> 15) + ReLU
    h2 = jnp.dot(w2_ref[...], h1, preferred_element_type=jnp.float32)
    h2 = jnp.maximum(h2 + b2_ref[...], 0.0)                   # (15, TB)

    # Output layer: Linear(15 -> 1) + sigmoid
    y = jnp.dot(w3_ref[...], h2, preferred_element_type=jnp.float32)
    y = y + b3_ref[...]                                       # (1, TB)
    # sigmoid: exp goes to the EUP; reciprocal instead of a VPU divide.
    y = pl.reciprocal(1.0 + jnp.exp(-y), approx=False)

    o_ref[...] = y.astype(o_ref.dtype)


def _round_up(n, m):
    return ((n + m - 1) // m) * m


@functools.partial(jax.jit, static_argnames=("tb",))
def mlp_forward(x, params, *, tb=8192):
    """x: (B, 10) float32.  params: dict of torch-layout (out, in) weights and
    (out,) biases.  Returns (B, 1) float32, matching the torch module."""
    B = x.shape[0]

    # Batch tile: multiple of 128 lanes, clamped to the (padded) batch.
    tb = min(tb, _round_up(B, 128))
    Bp = _round_up(B, tb)

    # Batch on the lane axis; pad batch to a whole number of tiles.
    xt = jnp.pad(x.T, ((0, 0), (0, Bp - B)))                  # (10, Bp)

    # Weights stay in torch (out, in) layout; biases become (out, 1) columns.
    w1 = params["w1"]; b1 = params["b1"][:, None]             # (15, 10), (15, 1)
    w2 = params["w2"]; b2 = params["b2"][:, None]             # (15, 15), (15, 1)
    w3 = params["w3"]; b3 = params["b3"][:, None]             # (1, 15),  (1, 1)
    # TODO(synk): for very large B, casting xt/weights to bf16 at this boundary
    # (keeping f32 accumulation) halves the HBM activation traffic.

    grid = (pl.cdiv(Bp, tb),)

    def resident(a):  # full array, same block every grid step -> stays in VMEM
        return pl.BlockSpec(a.shape, lambda i: (0, 0), memory_space=pltpu.VMEM)

    out = pl.pallas_call(
        mlp_kernel,
        out_shape=jax.ShapeDtypeStruct((1, Bp), jnp.float32),
        grid=grid,
        in_specs=[
            pl.BlockSpec((10, tb), lambda i: (0, i), memory_space=pltpu.VMEM),
            resident(w1), resident(b1),
            resident(w2), resident(b2),
            resident(w3), resident(b3),
        ],
        out_specs=pl.BlockSpec((1, tb), lambda i: (0, i),
                               memory_space=pltpu.VMEM),
        compiler_params=pltpu.CompilerParams(
            dimension_semantics=("parallel",),        # shard tiles across TCs
            vmem_limit_bytes=32 * 1024 * 1024,        # safe on v5e/v6e/v7x
        ),
    )(xt, w1, b1, w2, b2, w3, b3)

    # Drop batch padding and return in torch's (B, 1) layout.
    return out[0, :B][:, None]


def init_params(key):
    """Deterministic init mimicking nn.Linear (uniform +-1/sqrt(fan_in))."""
    ks = jax.random.split(key, 6)

    def lin(kw, kb, fan_in, fan_out):
        bound = 1.0 / jnp.sqrt(fan_in)
        w = jax.random.uniform(kw, (fan_out, fan_in), jnp.float32, -bound, bound)
        b = jax.random.uniform(kb, (fan_out,), jnp.float32, -bound, bound)
        return w, b

    w1, b1 = lin(ks[0], ks[1], 10, 15)
    w2, b2 = lin(ks[2], ks[3], 15, 15)
    w3, b3 = lin(ks[4], ks[5], 15, 1)
    return {"w1": w1, "b1": b1, "w2": w2, "b2": b2, "w3": w3, "b3": b3}


def reference_forward(x, p):
    h1 = jnp.maximum(x @ p["w1"].T + p["b1"], 0.0)
    h2 = jnp.maximum(h1 @ p["w2"].T + p["b2"], 0.0)
    y = h2 @ p["w3"].T + p["b3"]
    return jax.nn.sigmoid(y)


if __name__ == "__main__":
    key = jax.random.PRNGKey(0)
    k_x, k_p = jax.random.split(key)

    B = 500  # deliberately not a multiple of the tile -> exercises padding
    x = jax.random.normal(k_x, (B, 10), jnp.float32)
    params = init_params(k_p)

    out = mlp_forward(x, params, tb=128)   # grid of 4 batch tiles
    out = jax.block_until_ready(out)

    ref = reference_forward(x, params)
    assert out.shape == (B, 1), out.shape
    assert jnp.allclose(out, ref, atol=1e-5, rtol=1e-5), (
        float(jnp.max(jnp.abs(out - ref))))

    print("KERNEL_OK")
</pallas_src>

<mosaic_0001>
module attributes {stable_mosaic.version = 11 : i64} {
  func.func @mlp_kernel(%arg0: i32, %arg1: memref<10x128xf32, #tpu.memory_space<vmem>>, %arg2: memref<15x10xf32, #tpu.memory_space<vmem>>, %arg3: memref<15x1xf32, #tpu.memory_space<vmem>>, %arg4: memref<15x15xf32, #tpu.memory_space<vmem>>, %arg5: memref<15x1xf32, #tpu.memory_space<vmem>>, %arg6: memref<1x15xf32, #tpu.memory_space<vmem>>, %arg7: memref<1x1xf32, #tpu.memory_space<vmem>>, %arg8: memref<1x128xf32, #tpu.memory_space<vmem>>) attributes {dimension_semantics = [#tpu.dimension_semantics<parallel>], iteration_bounds = array<i64: 4>, scalar_prefetch = 0 : i64, scratch_operands = 0 : i64, tpu.core_type = #tpu.core_type<tc>, window_params = [{transform_indices = @transform_0, window_bounds = array<i64: 10, 128>}, {pipeline_mode = #tpu.pipeline_mode<synchronous>, transform_indices = @transform_1, window_bounds = array<i64: 15, 10>}, {pipeline_mode = #tpu.pipeline_mode<synchronous>, transform_indices = @transform_2, window_bounds = array<i64: 15, 1>}, {pipeline_mode = #tpu.pipeline_mode<synchronous>, transform_indices = @transform_3, window_bounds = array<i64: 15, 15>}, {pipeline_mode = #tpu.pipeline_mode<synchronous>, transform_indices = @transform_4, window_bounds = array<i64: 15, 1>}, {pipeline_mode = #tpu.pipeline_mode<synchronous>, transform_indices = @transform_5, window_bounds = array<i64: 1, 15>}, {pipeline_mode = #tpu.pipeline_mode<synchronous>, transform_indices = @transform_6, window_bounds = array<i64: 1, 1>}, {transform_indices = @transform_7, window_bounds = array<i64: 1, 128>}]} {
    %c0 = arith.constant 0 : index
    %c0_0 = arith.constant 0 : index
    %0 = vector.load %arg1[%c0, %c0_0] : memref<10x128xf32, #tpu.memory_space<vmem>>, vector<10x128xf32>
    %c0_1 = arith.constant 0 : index
    %c0_2 = arith.constant 0 : index
    %1 = vector.load %arg2[%c0_1, %c0_2] : memref<15x10xf32, #tpu.memory_space<vmem>>, vector<15x10xf32>
    %cst = arith.constant dense<0.000000e+00> : vector<15x128xf32>
    %2 = tpu.matmul %1, %0, %cst {dimension_numbers = #tpu.dot_dimension_numbers<[1], [0], [0], [1], [0, 0, 1, 1], [], []>} : vector<15x10xf32>, vector<10x128xf32>, vector<15x128xf32> -> vector<15x128xf32>
    %c0_3 = arith.constant 0 : index
    %c0_4 = arith.constant 0 : index
    %3 = vector.load %arg3[%c0_3, %c0_4] : memref<15x1xf32, #tpu.memory_space<vmem>>, vector<15x1xf32>
    %4 = vector.broadcast %3 : vector<15x1xf32> to vector<15x128xf32>
    %5 = arith.addf %2, %4 : vector<15x128xf32>
    %cst_5 = arith.constant 0.000000e+00 : f32
    %6 = vector.broadcast %cst_5 : f32 to vector<15x128xf32>
    %7 = arith.maximumf %5, %6 : vector<15x128xf32>
    %c0_6 = arith.constant 0 : index
    %c0_7 = arith.constant 0 : index
    %8 = vector.load %arg4[%c0_6, %c0_7] : memref<15x15xf32, #tpu.memory_space<vmem>>, vector<15x15xf32>
    %cst_8 = arith.constant dense<0.000000e+00> : vector<15x128xf32>
    %9 = tpu.matmul %8, %7, %cst_8 {dimension_numbers = #tpu.dot_dimension_numbers<[1], [0], [0], [1], [0, 0, 1, 1], [], []>} : vector<15x15xf32>, vector<15x128xf32>, vector<15x128xf32> -> vector<15x128xf32>
    %c0_9 = arith.constant 0 : index
    %c0_10 = arith.constant 0 : index
    %10 = vector.load %arg5[%c0_9, %c0_10] : memref<15x1xf32, #tpu.memory_space<vmem>>, vector<15x1xf32>
    %11 = vector.broadcast %10 : vector<15x1xf32> to vector<15x128xf32>
    %12 = arith.addf %9, %11 : vector<15x128xf32>
    %cst_11 = arith.constant 0.000000e+00 : f32
    %13 = vector.broadcast %cst_11 : f32 to vector<15x128xf32>
    %14 = arith.maximumf %12, %13 : vector<15x128xf32>
    %c0_12 = arith.constant 0 : index
    %c0_13 = arith.constant 0 : index
    %15 = vector.load %arg6[%c0_12, %c0_13] : memref<1x15xf32, #tpu.memory_space<vmem>>, vector<1x15xf32>
    %cst_14 = arith.constant dense<0.000000e+00> : vector<1x128xf32>
    %16 = tpu.matmul %15, %14, %cst_14 {dimension_numbers = #tpu.dot_dimension_numbers<[1], [0], [0], [1], [0, 0, 1, 1], [], []>} : vector<1x15xf32>, vector<15x128xf32>, vector<1x128xf32> -> vector<1x128xf32>
    %c0_15 = arith.constant 0 : index
    %c0_16 = arith.constant 0 : index
    %17 = vector.load %arg7[%c0_15, %c0_16] : memref<1x1xf32, #tpu.memory_space<vmem>>, vector<1x1xf32>
    %18 = vector.broadcast %17 : vector<1x1xf32> to vector<1x128xf32>
    %19 = arith.addf %16, %18 : vector<1x128xf32>
    %cst_17 = arith.constant 0.000000e+00 : f32
    %20 = vector.broadcast %cst_17 : f32 to vector<1x128xf32>
    %21 = arith.subf %20, %19 : vector<1x128xf32>
    %22 = math.exp %21 : vector<1x128xf32>
    %cst_18 = arith.constant 1.000000e+00 : f32
    %23 = vector.broadcast %cst_18 : f32 to vector<1x128xf32>
    %24 = arith.addf %23, %22 : vector<1x128xf32>
    %25 = tpu.reciprocal %24 : vector<1x128xf32> -> vector<1x128xf32>
    %c0_19 = arith.constant 0 : index
    %c0_20 = arith.constant 0 : index
    %26 = vector.load %arg8[%c0_19, %c0_20] : memref<1x128xf32, #tpu.memory_space<vmem>>, vector<1x128xf32>
    tpu.vector_store %arg8[%c0_19, %c0_20], %25 {strides = array<i32>} : memref<1x128xf32, #tpu.memory_space<vmem>>, vector<1x128xf32>,
    return
  }
  func.func @transform_0(%arg0: i32) -> (i32, i32) {
    %c0_i32 = arith.constant 0 : i32
    %c0_i32_0 = arith.constant 0 : i32
    return %c0_i32, %arg0 : i32, i32
  }
  func.func @transform_1(%arg0: i32) -> (i32, i32) {
    %c0_i32 = arith.constant 0 : i32
    %c0_i32_0 = arith.constant 0 : i32
    %c0_i32_1 = arith.constant 0 : i32
    return %c0_i32, %c0_i32_0 : i32, i32
  }
  func.func @transform_2(%arg0: i32) -> (i32, i32) {
    %c0_i32 = arith.constant 0 : i32
    %c0_i32_0 = arith.constant 0 : i32
    %c0_i32_1 = arith.constant 0 : i32
    return %c0_i32, %c0_i32_0 : i32, i32
  }
  func.func @transform_3(%arg0: i32) -> (i32, i32) {
    %c0_i32 = arith.constant 0 : i32
    %c0_i32_0 = arith.constant 0 : i32
    %c0_i32_1 = arith.constant 0 : i32
    return %c0_i32, %c0_i32_0 : i32, i32
  }
  func.func @transform_4(%arg0: i32) -> (i32, i32) {
    %c0_i32 = arith.constant 0 : i32
    %c0_i32_0 = arith.constant 0 : i32
    %c0_i32_1 = arith.constant 0 : i32
    return %c0_i32, %c0_i32_0 : i32, i32
  }
  func.func @transform_5(%arg0: i32) -> (i32, i32) {
    %c0_i32 = arith.constant 0 : i32
    %c0_i32_0 = arith.constant 0 : i32
    %c0_i32_1 = arith.constant 0 : i32
    return %c0_i32, %c0_i32_0 : i32, i32
  }
  func.func @transform_6(%arg0: i32) -> (i32, i32) {
    %c0_i32 = arith.constant 0 : i32
    %c0_i32_0 = arith.constant 0 : i32
    %c0_i32_1 = arith.constant 0 : i32
    return %c0_i32, %c0_i32_0 : i32, i32
  }
  func.func @transform_7(%arg0: i32) -> (i32, i32) {
    %c0_i32 = arith.constant 0 : i32
    %c0_i32_0 = arith.constant 0 : i32
    return %c0_i32, %arg0 : i32, i32
  }
}

</mosaic_0001>

<llo_original>
// kernel: mlp_forward.1
$region0: #{mlp_forward.1}
  #allocation0 [shape = 'u32[]', space=smem, size = 0x4, offset = 0x4, fixed_abs, tag = 'smem constant byte address 0x4 - core index']
  #allocation1 [shape = 'u32[72,128]{1,0:T(1,128)}', space=vmem, size = 0x9000, scoped, tag = 'internal scratch']
  #allocation2 [shape = 'f32[1,1]{1,0:T(1,128)S(1)}', space=vmem, size = 0x200, scoped, tag = 'scoped memory for mlp_forward.1']
  %s0 = inlined_call_operand.vmem [shape: f32[10,512], index: 0, kind: input, shape index: {}]
  %s1 = inlined_call_operand.vmem [shape: f32[15,10], index: 1, kind: input, shape index: {}]
  %s2 = inlined_call_operand.vmem [shape: f32[15,1], index: 2, kind: input, shape index: {}]
  %s3 = inlined_call_operand.vmem [shape: f32[15,15], index: 3, kind: input, shape index: {}]
  %s4 = inlined_call_operand.vmem [shape: f32[15,1], index: 4, kind: input, shape index: {}]
  %s5 = inlined_call_operand.vmem [shape: f32[1,15], index: 5, kind: input, shape index: {}]
  %s6 = inlined_call_operand.<no memory space> [shape: f32[1,1], index: 6, kind: input, shape index: {}]
  %s7 = inlined_call_operand.vmem [shape: f32[1,512], index: 7, kind: output, shape index: {}]
  %s8 = sld [smem:[#allocation0]]
  $region99: #{mlp_forward.1} parent=0
    _
  %s10 = ssub.s32 1, %s8
  %s11 = scalar_select 0, %s10, %s8
  %v12 = vstv %s6
  %13 = vst [vmem:[#allocation2] sm:$0x1] %v12
  $region1: #{mlp_forward.1} parent=0
    #allocation3 [shape = 'u8[16384]{0}', space=vmem, size = 0x4000, scoped, tag = 'input window, operand 0']
    loop: start=0, step=1, limit=6
    $region2: #{mlp_forward.1} parent=1 // loop_pre_header
      _
    $region3: #{mlp_forward.1} parent=1 // loop_header
      %s15 = sphi 0, %s19
      %p16 = scmp.ge.s32.totalorder %s15, 6
      %s25 = sphi 0, %s27
      %s28 = sphi 0, %s25
      %s29 = sphi 0, %s28
      %s45 = sphi 0, %s29
      %s49 = sphi 0, %s49
      %s51 = sphi 0, %s49
      %s52 = sphi 0, %s51
      %s66 = sphi 0, %s52
      %s70 = sphi 0, %s70
      %s72 = sphi 0, %s70
      %s73 = sphi 0, %s72
      %s87 = sphi 0, %s73
      %s91 = sphi 0, %s91
      %s93 = sphi 0, %s91
      %s94 = sphi 0, %s93
      %s108 = sphi 0, %s94
      %s112 = sphi 0, %s112
      %s114 = sphi 0, %s112
      %s115 = sphi 0, %s114
      %s129 = sphi 0, %s115
      %s133 = sphi 0, %s133
      %s135 = sphi 0, %s133
      %s136 = sphi 0, %s135
      %s150 = sphi 0, %s136
      %s154 = sphi 0, %s154
      %s156 = sphi 0, %s154
      %s157 = sphi 0, %s156
      %s171 = sphi 0, %s157
      %s177 = sphi 0, %s179
      %s180 = sphi 0, %s177
      %s181 = sphi 0, %s180
      %s197 = sphi 0, %s181
    $region4: #{mlp_forward.1} parent=1 // loop_header_branch
      %18 = sbr.rel (%p16) target = $region8
    $region5: #{mlp_forward.1} parent=1 // loop_body
      %s20 = ssub.s32 %s15, 1
      %s21 = ssub.s32 %s15, 2
      %s22 = sadd.s32 %s15, 1
      %s23 = ssub.s32 %s15, %s22
      %p24 = scmp.eq.s32.totalorder %s23, 0
      %s26 = sadd.s32 %s25, 1
      %s27 = scalar_select %p24, %s25, %s26
      %p30 = pneg %p24
      %p31 = scmp.eq.s32.totalorder %s15, 3
      %p32 = por %p30, %p31
      %p33 = scmp.ne.s32.totalorder %s25, %s28
      %p34 = scmp.eq.s32.totalorder %s15, 0
      %p35 = por %p33, %p34
      %p36 = scmp.ne.s32.totalorder %s25, %s28
      %p37 = scmp.eq.s32.totalorder %s20, 3
      %p38 = por %p36, %p37
      %p39 = scmp.ne.s32.totalorder %s28, %s29
      %p40 = scmp.eq.s32.totalorder %s20, 0
      %p41 = por %p39, %p40
      %p42 = scmp.ne.s32.totalorder %s28, %s29
      %p43 = scmp.eq.s32.totalorder %s21, 3
      %p44 = por %p42, %p43
      %p46 = scmp.ne.s32.totalorder %s29, %s45
      %p47 = scmp.eq.s32.totalorder %s21, 0
      %p48 = por %p46, %p47
      %s50 = sadd.s32 %s49, 1
      %p53 = scmp.eq.s32.totalorder %s15, 3
      %p54 = scmp.ne.s32.totalorder %s49, %s51
      %p55 = scmp.eq.s32.totalorder %s15, 0
      %p56 = por %p54, %p55
      %p57 = scmp.ne.s32.totalorder %s49, %s51
      %p58 = scmp.eq.s32.totalorder %s20, 3
      %p59 = por %p57, %p58
      %p60 = scmp.ne.s32.totalorder %s51, %s52
      %p61 = scmp.eq.s32.totalorder %s20, 0
      %p62 = por %p60, %p61
      %p63 = scmp.ne.s32.totalorder %s51, %s52
      %p64 = scmp.eq.s32.totalorder %s21, 3
      %p65 = por %p63, %p64
      %p67 = scmp.ne.s32.totalorder %s52, %s66
      %p68 = scmp.eq.s32.totalorder %s21, 0
      %p69 = por %p67, %p68
      %s71 = sadd.s32 %s70, 1
      %p74 = scmp.eq.s32.totalorder %s15, 3
      %p75 = scmp.ne.s32.totalorder %s70, %s72
      %p76 = scmp.eq.s32.totalorder %s15, 0
      %p77 = por %p75, %p76
      %p78 = scmp.ne.s32.totalorder %s70, %s72
      %p79 = scmp.eq.s32.totalorder %s20, 3
      %p80 = por %p78, %p79
      %p81 = scmp.ne.s32.totalorder %s72, %s73
      %p82 = scmp.eq.s32.totalorder %s20, 0
      %p83 = por %p81, %p82
      %p84 = scmp.ne.s32.totalorder %s72, %s73
      %p85 = scmp.eq.s32.totalorder %s21, 3
      %p86 = por %p84, %p85
      %p88 = scmp.ne.s32.totalorder %s73, %s87
      %p89 = scmp.eq.s32.totalorder %s21, 0
      %p90 = por %p88, %p89
      %s92 = sadd.s32 %s91, 1
      %p95 = scmp.eq.s32.totalorder %s15, 3
      %p96 = scmp.ne.s32.totalorder %s91, %s93
      %p97 = scmp.eq.s32.totalorder %s15, 0
      %p98 = por %p96, %p97
      %p99 = scmp.ne.s32.totalorder %s91, %s93
      %p100 = scmp.eq.s32.totalorder %s20, 3
      %p101 = por %p99, %p100
      %p102 = scmp.ne.s32.totalorder %s93, %s94
      %p103 = scmp.eq.s32.totalorder %s20, 0
      %p104 = por %p102, %p103
      %p105 = scmp.ne.s32.totalorder %s93, %s94
      %p106 = scmp.eq.s32.totalorder %s21, 3
      %p107 = por %p105, %p106
      %p109 = scmp.ne.s32.totalorder %s94, %s108
      %p110 = scmp.eq.s32.totalorder %s21, 0
      %p111 = por %p109, %p110
      %s113 = sadd.s32 %s112, 1
      %p116 = scmp.eq.s32.totalorder %s15, 3
      %p117 = scmp.ne.s32.totalorder %s112, %s114
      %p118 = scmp.eq.s32.totalorder %s15, 0
      %p119 = por %p117, %p118
      %p120 = scmp.ne.s32.totalorder %s112, %s114
      %p121 = scmp.eq.s32.totalorder %s20, 3
      %p122 = por %p120, %p121
      %p123 = scmp.ne.s32.totalorder %s114, %s115
      %p124 = scmp.eq.s32.totalorder %s20, 0
      %p125 = por %p123, %p124
      %p126 = scmp.ne.s32.totalorder %s114, %s115
      %p127 = scmp.eq.s32.totalorder %s21, 3
      %p128 = por %p126, %p127
      %p130 = scmp.ne.s32.totalorder %s115, %s129
      %p131 = scmp.eq.s32.totalorder %s21, 0
      %p132 = por %p130, %p131
      %s134 = sadd.s32 %s133, 1
      %p137 = scmp.eq.s32.totalorder %s15, 3
      %p138 = scmp.ne.s32.totalorder %s133, %s135
      %p139 = scmp.eq.s32.totalorder %s15, 0
      %p140 = por %p138, %p139
      %p141 = scmp.ne.s32.totalorder %s133, %s135
      %p142 = scmp.eq.s32.totalorder %s20, 3
      %p143 = por %p141, %p142
      %p144 = scmp.ne.s32.totalorder %s135, %s136
      %p145 = scmp.eq.s32.totalorder %s20, 0
      %p146 = por %p144, %p145
      %p147 = scmp.ne.s32.totalorder %s135, %s136
      %p148 = scmp.eq.s32.totalorder %s21, 3
      %p149 = por %p147, %p148
      %p151 = scmp.ne.s32.totalorder %s136, %s150
      %p152 = scmp.eq.s32.totalorder %s21, 0
      %p153 = por %p151, %p152
      %s155 = sadd.s32 %s154, 1
      %p158 = scmp.eq.s32.totalorder %s15, 3
      %p159 = scmp.ne.s32.totalorder %s154, %s156
      %p160 = scmp.eq.s32.totalorder %s15, 0
      %p161 = por %p159, %p160
      %p162 = scmp.ne.s32.totalorder %s154, %s156
      %p163 = scmp.eq.s32.totalorder %s20, 3
      %p164 = por %p162, %p163
      %p165 = scmp.ne.s32.totalorder %s156, %s157
      %p166 = scmp.eq.s32.totalorder %s20, 0
      %p167 = por %p165, %p166
      %p168 = scmp.ne.s32.totalorder %s156, %s157
      %p169 = scmp.eq.s32.totalorder %s21, 3
      %p170 = por %p168, %p169
      %p172 = scmp.ne.s32.totalorder %s157, %s171
      %p173 = scmp.eq.s32.totalorder %s21, 0
      %p174 = por %p172, %p173
      %s175 = ssub.s32 %s15, %s22
      %p176 = scmp.eq.s32.totalorder %s175, 0
      %s178 = sadd.s32 %s177, 1
      %s179 = scalar_select %p176, %s177, %s178
      %p182 = pneg %p176
      %p183 = scmp.eq.s32.totalorder %s15, 3
      %p184 = por %p182, %p183
      %p185 = scmp.ne.s32.totalorder %s177, %s180
      %p186 = scmp.eq.s32.totalorder %s15, 0
      %p187 = por %p185, %p186
      %p188 = scmp.ne.s32.totalorder %s177, %s180
      %p189 = scmp.eq.s32.totalorder %s20, 3
      %p190 = por %p188, %p189
      %p191 = scmp.ne.s32.totalorder %s180, %s181
      %p192 = scmp.eq.s32.totalorder %s20, 0
      %p193 = por %p191, %p192
      %p194 = scmp.ne.s32.totalorder %s180, %s181
      %p195 = scmp.eq.s32.totalorder %s21, 3
      %p196 = por %p194, %p195
      %p198 = scmp.ne.s32.totalorder %s181, %s197
      %p199 = scmp.eq.s32.totalorder %s21, 0
      %p200 = por %p198, %p199
      %p201 = scmp.le.s32.totalorder 1, %s15
      %p202 = scmp.lt.s32.totalorder %s15, 5
      %p203 = pnand %p201, %p202
      %p204 = pneg %p203
      // Predicated region
      $region9: #{mlp_forward.1} parent=5 // pred_check
        _
      $region10: #{mlp_forward.1} parent=5 // pred_check_branch
        %206 = sbr.rel (%p203) target = $region12
      $region11: #{mlp_forward.1} parent=5 // pred_region
        %s207 = ssub.s32 %s15, 1
        // Predicated region
        $region13: #{mlp_forward.1} parent=11 // pred_check
          %p208 = pneg %p62
        $region14: #{mlp_forward.1} parent=11 // pred_check_branch
          %210 = sbr.rel (%p208) target = $region16
        $region15: #{mlp_forward.1} parent=11 // pred_region
          _
        $region16: #{mlp_forward.1} parent=11 // pred_fallthru
          _
        // Predicated region
        $region17: #{mlp_forward.1} parent=11 // pred_check
          %p211 = pneg %p83
        $region18: #{mlp_forward.1} parent=11 // pred_check_branch
          %213 = sbr.rel (%p211) target = $region20
        $region19: #{mlp_forward.1} parent=11 // pred_region
          _
        $region20: #{mlp_forward.1} parent=11 // pred_fallthru
          _
        // Predicated region
        $region21: #{mlp_forward.1} parent=11 // pred_check
          %p214 = pneg %p104
        $region22: #{mlp_forward.1} parent=11 // pred_check_branch
          %216 = sbr.rel (%p214) target = $region24
        $region23: #{mlp_forward.1} parent=11 // pred_region
          _
        $region24: #{mlp_forward.1} parent=11 // pred_fallthru
          _
        // Predicated region
        $region25: #{mlp_forward.1} parent=11 // pred_check
          %p217 = pneg %p125
        $region26: #{mlp_forward.1} parent=11 // pred_check_branch
          %219 = sbr.rel (%p217) target = $region28
        $region27: #{mlp_forward.1} parent=11 // pred_region
          _
        $region28: #{mlp_forward.1} parent=11 // pred_fallthru
          _
        // Predicated region
        $region29: #{mlp_forward.1} parent=11 // pred_check
          %p220 = pneg %p146
        $region30: #{mlp_forward.1} parent=11 // pred_check_branch
          %222 = sbr.rel (%p220) target = $region32
        $region31: #{mlp_forward.1} parent=11 // pred_region
          _
        $region32: #{mlp_forward.1} parent=11 // pred_fallthru
          _
        // Predicated region
        $region33: #{mlp_forward.1} parent=11 // pred_check
          %p223 = pneg %p167
        $region34: #{mlp_forward.1} parent=11 // pred_check_branch
          %225 = sbr.rel (%p223) target = $region36
        $region35: #{mlp_forward.1} parent=11 // pred_region
          _
        $region36: #{mlp_forward.1} parent=11 // pred_fallthru
          _
      $region12: #{mlp_forward.1} parent=5 // pred_fallthru
        _
      %p226 = scmp.lt.s32.totalorder %s15, 4
      // Predicated region
      $region37: #{mlp_forward.1} parent=5 // pred_check
        %p227 = pneg %p226
      $region38: #{mlp_forward.1} parent=5 // pred_check_branch
        %229 = sbr.rel (%p227) target = $region40
      $region39: #{mlp_forward.1} parent=5 // pred_region
        // Predicated region
        $region41: #{mlp_forward.1} parent=39 // pred_check
          %p230 = pneg %p35
        $region42: #{mlp_forward.1} parent=39 // pred_check_branch
          %232 = sbr.rel (%p230) target = $region44
        $region43: #{mlp_forward.1} parent=39 // pred_region
          %s233 = sand.u32 %s25, 1
          %s234 = sand.u32 %s25, 1
          %s235 = smul.addr %s234, 16
          %s236 = scalar_lea.vmem [#allocation3], %s235
          %s237 = smul.addr %s15, 8
          %s238 = scalar_lea.vmem %s0, %s237
          // Predicated region
          $region45: #{mlp_forward.1} parent=43 // pred_check
            _
          $region46: #{mlp_forward.1} parent=43 // pred_check_branch
            %240 = sbr.rel (0) target = $region48
          $region47: #{mlp_forward.1} parent=43 // pred_region
            // Predicated region
            $region49: #{mlp_forward.1} parent=47 // pred_check
              _
            $region50: #{mlp_forward.1} parent=47 // pred_check_branch
              %242 = sbr.rel (0) target = $region52
            $region51: #{mlp_forward.1} parent=47 // pred_region
              // Predicated region
              $region64: #{mlp_forward.1} parent=51 // pred_check
                _
              $region65: #{mlp_forward.1} parent=51 // pred_check_branch
                %260 = sbr.rel (0) target = $region67
              $region66: #{mlp_forward.1} parent=51 // pred_region
                loop: start=0, step=1, limit=1
                $region68: #{mlp_forward.1} parent=66 // loop_pre_header
                  _
                $region69: #{mlp_forward.1} parent=66 // loop_header
                  %s262 = sphi 0, %s266
                  %p263 = scmp.ge.s32.totalorder %s262, 1
                  %s267 = sphi %s238, %s238
                  %s268 = sphi %s236, %s236
                $region70: #{mlp_forward.1} parent=66 // loop_header_branch
                  %265 = sbr.rel (%p263) target = $region74
                $region71: #{mlp_forward.1} parent=66 // loop_body
                  %v269 = vld [vmem:[%s267] sm:$0xff]
                  %270 = vst [vmem:[%s268] sm:$0xff] %v269
                  %v271 = vld [vmem:[%s267 + $0x20] sm:$0xff]
                  %272 = vst [vmem:[%s268 + $0x8] sm:$0xff] %v271
                $region72: #{mlp_forward.1} parent=66 // loop_footer
                  %s266 = sadd.s32 1, %s262
                $region73: #{mlp_forward.1} parent=66 // loop_footer_branch
                  %261 = sbr.rel target = $region69
                $region74: #{mlp_forward.1} parent=66 // loop_exit
                  _
              $region67: #{mlp_forward.1} parent=51 // pred_fallthru
                _
              // Predicated region
              $region75: #{mlp_forward.1} parent=51 // pred_check
                _
              $region76: #{mlp_forward.1} parent=51 // pred_check_branch
                %274 = sbr.rel target = $region78
              $region77: #{mlp_forward.1} parent=51 // pred_region
                _
              $region78: #{mlp_forward.1} parent=51 // pred_fallthru
                _
            $region52: #{mlp_forward.1} parent=47 // pred_fallthru
              _
            // Predicated region
            $region53: #{mlp_forward.1} parent=47 // pred_check
              _
            $region54: #{mlp_forward.1} parent=47 // pred_check_branch
              %244 = sbr.rel target = $region56
            $region55: #{mlp_forward.1} parent=47 // pred_region
              %s246 = ssub.s32 256, 1
              loop: start=0, step=1, limit=1
              $region57: #{mlp_forward.1} parent=55 // loop_pre_header
                _
              $region58: #{mlp_forward.1} parent=55 // loop_header
                %s248 = sphi 0, %s252
                %p249 = scmp.ge.s32.totalorder %s248, 1
                %s253 = sphi %s238, %s238
                %s254 = sphi %s236, %s236
              $region59: #{mlp_forward.1} parent=55 // loop_header_branch
                %251 = sbr.rel (%p249) target = $region63
              $region60: #{mlp_forward.1} parent=55 // loop_body
                %v255 = vld [vmem:[%s253] sm:%s246]
                %256 = vst [vmem:[%s254] sm:%s246] %v255
                %v257 = vld [vmem:[%s253 + $0x20] sm:%s246]
                %258 = vst [vmem:[%s254 + $0x8] sm:%s246] %v257
              $region61: #{mlp_forward.1} parent=55 // loop_footer
                %s252 = sadd.s32 1, %s248
              $region62: #{mlp_forward.1} parent=55 // loop_footer_branch
                %247 = sbr.rel target = $region58
              $region63: #{mlp_forward.1} parent=55 // loop_exit
                _
            $region56: #{mlp_forward.1} parent=47 // pred_fallthru
              _
          $region48: #{mlp_forward.1} parent=43 // pred_fallthru
            _
          %275 = vnop
        $region44: #{mlp_forward.1} parent=39 // pred_fallthru
          _
      $region40: #{mlp_forward.1} parent=5 // pred_fallthru
        _
      %p276 = scmp.le.s32.totalorder 1, %s15
      %p277 = scmp.lt.s32.totalorder %s15, 5
      %p278 = pnand %p276, %p277
      %p279 = pneg %p278
      // Predicated region
      $region79: #{mlp_forward.1} parent=5 // pred_check
        _
      $region80: #{mlp_forward.1} parent=5 // pred_check_branch
        %281 = sbr.rel (%p278) target = $region82
      $region81: #{mlp_forward.1} parent=5 // pred_region
        %s282 = ssub.s32 %s15, 1
        %s283 = sand.u32 %s28, 1
        %s284 = sand.u32 %s28, 1
        %s285 = smul.addr %s284, 16
        %s286 = scalar_lea.vmem [#allocation3], %s285
        // Predicated region
        $region83: #{mlp_forward.1} parent=81 // pred_check
          %p287 = pneg %p41
        $region84: #{mlp_forward.1} parent=81 // pred_check_branch
          %289 = sbr.rel (%p287) target = $region86
        $region85: #{mlp_forward.1} parent=81 // pred_region
          _
        $region86: #{mlp_forward.1} parent=81 // pred_fallthru
          _
        %s290 = sand.u32 %s28, 1
        %s291 = sand.u32 %s28, 1
        %s292 = smul.addr %s291, 16
        %s293 = scalar_lea.vmem [#allocation3], %s292
        %p294 = pneg %p41
        %p295 = pneg %p38
        %p296 = pneg %p62
        %p297 = pneg %p59
        %p298 = pneg %p83
        %p299 = pneg %p80
        %p300 = pneg %p104
        %p301 = pneg %p101
        %p302 = pneg %p125
        %p303 = pneg %p122
        %p304 = pneg %p146
        %p305 = pneg %p143
        %p306 = pneg %p167
        %p307 = pneg %p164
        %p308 = pneg %p193
        %p309 = pneg %p190
        %p310 = scmp.lt.s32.totalorder %s20, 3
        %s311 = scalar_select %p310, %s20, 3
        %s312 = scalar_lea.vmem %s7, %s311
        %p313 = scmp.lt.s32.totalorder %s20, 3
        %s314 = scalar_select %p313, %s20, 3
        %s315 = scalar_lea.vmem %s7, %s314
        %v316 = vld [vmem:[%s286] sm:$0xff]
        %v317 = vld [vmem:[%s286 + $0x8] sm:$0x3]
        %v318 = vld [vmem:[%s1] sm:$0xff]
        %v319 = vld [vmem:[%s1 + $0x8] sm:$0x7f]
        %v320 = vld [vmem:[%s2] sm:$0xff]
        %v321 = vld [vmem:[%s2 + $0x8] sm:$0x7f]
        %323 = vset.pattern.permute.xlu0 0
        %324 = vperm.xlu0 %323, %v320
        %v325 = vpop.permute.xlu0 %324
        %328 = vset.pattern.permute.xlu0 0
        %329 = vperm.xlu0 %328, %v321
        %v330 = vpop.permute.xlu0 %329
        %vm332 = vcmask 80896
        %v334 = vsel %vm332, %v318, 0
        %v337 = vsel %vm332, %v319, 0
        %vm339 = vcmask 1041408
        %v341 = vsel %vm339, %v317, 0
        %343 = vmatpush.msra.mxu0 0.0
        %344 = vmatpush.msra.mxu0 0.0
        %345 = vmatpush.msra.mxu0 0.0
        %346 = vmatpush.msra.mxu0 0.0
        %347 = vmatpush.msra.mxu0 0.0
        %348 = vmatpush.msra.mxu0 0.0
        %349 = vmatpush.msra.mxu0 0.0
        %350 = vmatpush.msra.mxu0 0.0
        %351 = vmatpush.msra.mxu0 0.0
        %352 = vmatpush.msra.mxu0 0.0
        %353 = vmatpush.msra.mxu0 0.0
        %354 = vmatpush.msra.mxu0 0.0
        %355 = vmatpush.msra.mxu0 0.0
        %356 = vmatpush.msra.mxu0 0.0
        %357 = vmatpush.msra.mxu0 %v341
        %358 = vmatpush.msra.mxu0 %v316
        %359 = vmatmul.f32.gmra.mxu0 %v334
        %v360 = vpop.f32.mrf.mxu0
        %v361 = vadd.f32 %v325, %v360
        %362 = vmatmul.f32.gmra.mxu0 %v337
        %v363 = vpop.f32.mrf.mxu0
        %v364 = vadd.f32 %v330, %v363
        %365 = vdwg.mxu0
        %v366 = vmax.f32 %v361, 0.0
        %v367 = vmax.f32 %v364, 0.0
        %v368 = vld [vmem:[%s3] sm:$0xff]
        %v369 = vld [vmem:[%s3 + $0x8] sm:$0x7f]
        %v370 = vld [vmem:[%s4] sm:$0xff]
        %v371 = vld [vmem:[%s4 + $0x8] sm:$0x7f]
        %373 = vset.pattern.permute.xlu0 0
        %374 = vperm.xlu0 %373, %v370
        %v375 = vpop.permute.xlu0 %374
        %378 = vset.pattern.permute.xlu0 0
        %379 = vperm.xlu0 %378, %v371
        %v380 = vpop.permute.xlu0 %379
        %vm382 = vcmask 121856
        %v384 = vsel %vm382, %v368, 0
        %v387 = vsel %vm382, %v369, 0
        %vm389 = vcmask 1046528
        %v391 = vsel %vm389, %v367, 0
        %393 = vmatpush.msra.mxu0 0.0
        %394 = vmatpush.msra.mxu0 0.0
        %395 = vmatpush.msra.mxu0 0.0
        %396 = vmatpush.msra.mxu0 0.0
        %397 = vmatpush.msra.mxu0 0.0
        %398 = vmatpush.msra.mxu0 0.0
        %399 = vmatpush.msra.mxu0 0.0
        %400 = vmatpush.msra.mxu0 0.0
        %401 = vmatpush.msra.mxu0 0.0
        %402 = vmatpush.msra.mxu0 0.0
        %403 = vmatpush.msra.mxu0 0.0
        %404 = vmatpush.msra.mxu0 0.0
        %405 = vmatpush.msra.mxu0 0.0
        %406 = vmatpush.msra.mxu0 0.0
        %407 = vmatpush.msra.mxu0 %v391
        %408 = vmatpush.msra.mxu0 %v366
        %409 = vmatmul.f32.gmra.mxu0 %v384
        %v410 = vpop.f32.mrf.mxu0
        %v411 = vadd.f32 %v375, %v410
        %412 = vmatmul.f32.gmra.mxu0 %v387
        %v413 = vpop.f32.mrf.mxu0
        %v414 = vadd.f32 %v380, %v413
        %415 = vdwg.mxu0
        %v416 = vmax.f32 %v411, 0.0
        %v417 = vmax.f32 %v414, 0.0
        %v418 = vld [vmem:[%s5] sm:$0x1]
        %v419 = vld [vmem:[#allocation2] sm:$0x1]
        %421 = vset.pattern.permute.xlu0 0
        %422 = vperm.xlu0 %421, %v419
        %v423 = vpop.permute.xlu0 %422
        %v425 = vperm.slane %v423, 0
        %v427 = vsel %vm382, %v418, 0
        %v430 = vsel %vm389, %v417, 0
        %432 = vmatpush.msra.mxu0 0.0
        %433 = vmatpush.msra.mxu0 0.0
        %434 = vmatpush.msra.mxu0 0.0
        %435 = vmatpush.msra.mxu0 0.0
        %436 = vmatpush.msra.mxu0 0.0
        %437 = vmatpush.msra.mxu0 0.0
        %438 = vmatpush.msra.mxu0 0.0
        %439 = vmatpush.msra.mxu0 0.0
        %440 = vmatpush.msra.mxu0 0.0
        %441 = vmatpush.msra.mxu0 0.0
        %442 = vmatpush.msra.mxu0 0.0
        %443 = vmatpush.msra.mxu0 0.0
        %444 = vmatpush.msra.mxu0 0.0
        %445 = vmatpush.msra.mxu0 0.0
        %446 = vmatpush.msra.mxu0 %v430
        %447 = vmatpush.msra.mxu0 %v416
        %448 = vmatmul.f32.gmra.mxu0 %v427
        %v449 = vpop.f32.mrf.mxu0
        %v450 = vadd.f32 %v425, %v449
        %451 = vdwg.mxu0
        %v452 = vsub.f32 0.0, %v450
        %v453 = vmul.f32 %v452, 1.442695
        %v454 = vpow.pop %v453
        %v455 = vadd.f32 %v454, 1.0
        %v456 = vrcp.pop %v455
        %v457 = vmul.f32 %v455, %v456
        %v458 = vsub.f32 1.0, %v457
        %v459 = vmul.f32 %v456, %v458
        %v460 = vadd.f32 %v456, %v459
        %vm461 = vweird.f32 %v455
        %vm462 = vweird.f32 %v456
        %vm463 = vmor %vm461, %vm462
        %v464 = vsel %vm463, %v456, %v460
        %v465 = vand.u32 2147483647, %v455
        %vm466 = vcmp.eq.f32.partialorder %v465, 8.507059e+37
        %v467 = vand.u32 %v455, 2147483648
        %v468 = vor.u32 1.1754944e-38, %v467
        %v469 = vsel %vm466, %v468, %v464
        %470 = vst [vmem:[%s315] sm:$0x1] %v469
        %p471 = scmp.lt.s32.totalorder %s20, 3
        %s472 = scalar_select %p471, %s20, 3
        %s473 = scalar_lea.vmem %s7, %s472
        // Predicated region
        $region87: #{mlp_forward.1} parent=81 // pred_check
          %p474 = pneg %p190
        $region88: #{mlp_forward.1} parent=81 // pred_check_branch
          %476 = sbr.rel (%p474) target = $region90
        $region89: #{mlp_forward.1} parent=81 // pred_region
          _
        $region90: #{mlp_forward.1} parent=81 // pred_fallthru
          _
      $region82: #{mlp_forward.1} parent=5 // pred_fallthru
        _
      %p477 = scmp.le.s32.totalorder 2, %s15
      // Predicated region
      $region91: #{mlp_forward.1} parent=5 // pred_check
        %p478 = pneg %p477
      $region92: #{mlp_forward.1} parent=5 // pred_check_branch
        %480 = sbr.rel (%p478) target = $region94
      $region93: #{mlp_forward.1} parent=5 // pred_region
        %s481 = ssub.s32 %s15, 2
        // Predicated region
        $region95: #{mlp_forward.1} parent=93 // pred_check
          %p482 = pneg %p196
        $region96: #{mlp_forward.1} parent=93 // pred_check_branch
          %484 = sbr.rel (%p482) target = $region98
        $region97: #{mlp_forward.1} parent=93 // pred_region
          %p485 = scmp.lt.s32.totalorder %s21, 3
          %s486 = scalar_select %p485, %s21, 3
          %s487 = scalar_lea.vmem %s7, %s486
        $region98: #{mlp_forward.1} parent=93 // pred_fallthru
          _
      $region94: #{mlp_forward.1} parent=5 // pred_fallthru
        _
    $region6: #{mlp_forward.1} parent=1 // loop_footer
      %s19 = sadd.s32 1, %s15
    $region7: #{mlp_forward.1} parent=1 // loop_footer_branch
      %14 = sbr.rel target = $region3
    $region8: #{mlp_forward.1} parent=1 // loop_exit
      _

</llo_original>
